<compile_context>
chip_gen: v7x
topology: tpu7x:2x2x1
jax: 0.10.0
libtpu: 0.0.40
codegen_flags: <defaults>
</compile_context>

<pallas_src>
import functools

import jax
import jax.numpy as jnp
from jax.experimental import pallas as pl
from jax.experimental.pallas import tpu as pltpu


def _round_up(x, m):
    return ((x + m - 1) // m) * m


def _cdiv(a, b):
    return (a + b - 1) // b


def _vmem_limit_bytes():
    """Generation-aware scoped-VMEM budget.

    Physical VMEM: v5e/v6e 128 MiB, v4 ~128 MiB, v7x 64 MiB per TensorCore.
    """
    try:
        kind = jax.devices()[0].device_kind.lower()
    except Exception:
        kind = ""
    if "v5" in kind or "v6" in kind:
        return 96 * 1024 * 1024
    if "v4" in kind:
        return 64 * 1024 * 1024
    if "v2" in kind or "v3" in kind:
        return 16 * 1024 * 1024
    if "7" in kind:                       # v7x: 64 MiB physical -> leave headroom
        return 44 * 1024 * 1024
    return 32 * 1024 * 1024


# ---- small/medium-M fast path: x + full K resident, 1-D grid over N ---------
def _linear_resident_x_kernel(x_ref, w_ref, b_ref, o_ref):
    acc = jnp.dot(x_ref[...], w_ref[...], preferred_element_type=jnp.float32)
    o_ref[...] = (acc + b_ref[...]).astype(o_ref.dtype)


# ---- general tiled path, f32 output: accumulate directly into o_ref ---------
def _linear_tiled_kernel_f32(x_ref, w_ref, b_ref, o_ref):
    k = pl.program_id(2)

    @pl.when(k == 0)
    def _():
        o_ref[...] = jnp.broadcast_to(b_ref[...], o_ref.shape).astype(o_ref.dtype)

    o_ref[...] += jnp.dot(x_ref[...], w_ref[...], preferred_element_type=jnp.float32)


# ---- general tiled path, non-f32 output: f32 VMEM scratch accumulator -------
def _linear_tiled_kernel_acc(x_ref, w_ref, b_ref, o_ref, acc_ref):
    k = pl.program_id(2)

    @pl.when(k == 0)
    def _():
        acc_ref[...] = jnp.zeros_like(acc_ref)

    acc_ref[...] += jnp.dot(x_ref[...], w_ref[...], preferred_element_type=jnp.float32)

    @pl.when(k == pl.num_programs(2) - 1)
    def _():
        o_ref[...] = (acc_ref[...] + b_ref[...]).astype(o_ref.dtype)


def prepare_fc_params(weight, bias=None, *, compute_dtype=None):
    """One-time preparation of nn.Linear params for the Pallas kernel.

    weight: [fout, fin] (PyTorch layout), bias: [fout] or None.
    Returns:
      w_prep: [round_up(fin,128), fout] -- transposed so the contraction dim is
              on the sublane axis; K zero-padded and (optionally) cast HERE so
              the per-forward path never touches the weight again.
      b_prep: [1, fout] float32.
    """
    fout, fin = weight.shape
    kp = _round_up(fin, 128)
    w = weight.astype(compute_dtype) if compute_dtype is not None else weight
    w_prep = jnp.pad(w.T, ((0, kp - fin), (0, 0)))       # [Kp, N], zeros in padded K
    b = jnp.zeros((fout,), jnp.float32) if bias is None else bias.astype(jnp.float32)
    return w_prep, b.reshape(1, fout)


@jax.jit
def fcblock_svd_forward(x, w_prep, b_prep):
    """FCBlock_SVD forward (task_id == -1): y = x @ W.T + b.

    x:      [..., fin]   arbitrary leading batch dims (like nn.Linear)
    w_prep: [Kp, fout]   prepared by prepare_fc_params (Kp = round_up(fin,128))
    b_prep: [1, fout]    float32
    Output dtype matches x's dtype; accumulation is always float32.
    """
    orig_shape = x.shape
    K = orig_shape[-1]
    Kp, N = w_prep.shape
    if not (K <= Kp and Kp == _round_up(K, 128)):
        raise ValueError("w_prep K dim does not match x feature dim")
    out_dtype = x.dtype

    x2 = x.reshape(-1, K)
    if x2.dtype != w_prep.dtype:
        x2 = x2.astype(w_prep.dtype)          # cast at the boundary, not in-kernel
    if Kp != K:
        x2 = jnp.pad(x2, ((0, 0), (0, Kp - K)))   # K MUST be zero-padded (reduction)
    M = x2.shape[0]
    Np128 = _round_up(N, 128)

    xsize = x2.dtype.itemsize
    wsize = w_prep.dtype.itemsize
    osize = jnp.dtype(out_dtype).itemsize

    vmem_limit = _vmem_limit_bytes()
    budget = int(vmem_limit * 0.7)

    flops = 2 * M * N * K
    bytes_accessed = M * K * xsize + Kp * N * wsize + M * N * osize + N * 4
    cost = pl.CostEstimate(flops=flops, bytes_accessed=bytes_accessed,
                           transcendentals=0)

    # ---- fast path: whole x (and full K) resident, grid over N only --------
    use_fast, tn_fast = False, 0
    if M <= 1024:
        m_sub = _round_up(M, 8)                     # sublane-padded footprint
        x_bytes = m_sub * Kp * xsize                # constant index_map: fetched once
        for cand in (1024, 512, 256, 128):
            tn_c = min(cand, Np128)
            blk_bytes = (2 * Kp * tn_c * wsize            # W slab (double-buffered)
                         + 2 * m_sub * tn_c * max(osize, 4)   # output block
                         + 2 * tn_c * 4)                       # bias
            if x_bytes + blk_bytes <= budget:
                use_fast, tn_fast = True, tn_c
                break
        # Prefer >= 2 column blocks so dual-TensorCore chips (v7x/v4/v5p) use
        # both cores; costs ~one extra grid step on single-TC chips.
        if use_fast and _cdiv(N, tn_fast) < 2 and Np128 > 128:
            tn_fast = max(128, _round_up(Np128 // 2, 128))

    if use_fast:
        out = pl.pallas_call(
            _linear_resident_x_kernel,
            out_shape=jax.ShapeDtypeStruct((M, N), out_dtype),
            grid_spec=pltpu.PrefetchScalarGridSpec(
                num_scalar_prefetch=0,
                grid=(_cdiv(N, tn_fast),),
                in_specs=[
                    pl.BlockSpec((M, Kp), lambda j: (0, 0)),         # x resident
                    pl.BlockSpec((Kp, tn_fast), lambda j: (0, j)),   # W slab [K, N]
                    pl.BlockSpec((1, tn_fast), lambda j: (0, j)),    # bias slab
                ],
                out_specs=pl.BlockSpec((M, tn_fast), lambda j: (0, j)),
            ),
            compiler_params=pltpu.CompilerParams(
                dimension_semantics=("parallel",),
                vmem_limit_bytes=vmem_limit,
            ),
            cost_estimate=cost,
        )(x2, w_prep, b_prep)
        return out.reshape(orig_shape[:-1] + (N,))

    # ---- general tiled path: 3-D grid, k innermost reduction ----------------
    tm = M if M <= 512 else 512                     # full-dim block when small
    tn = min(512, Np128)
    if Kp <= 1024:
        tk = Kp
    else:
        tk = next(t for t in (1024, 512, 256, 128) if Kp % t == 0)
    grid = (_cdiv(M, tm), _cdiv(N, tn), Kp // tk)

    if out_dtype == jnp.float32:
        kernel = _linear_tiled_kernel_f32
        scratch = []
    else:
        kernel = _linear_tiled_kernel_acc
        scratch = [pltpu.VMEM((tm, tn), jnp.float32)]

    out = pl.pallas_call(
        kernel,
        out_shape=jax.ShapeDtypeStruct((M, N), out_dtype),
        grid_spec=pltpu.PrefetchScalarGridSpec(
            num_scalar_prefetch=0,
            grid=grid,
            in_specs=[
                pl.BlockSpec((tm, tk), lambda i, j, k: (i, k)),   # x tile
                pl.BlockSpec((tk, tn), lambda i, j, k: (k, j)),   # W tile [K, N]
                pl.BlockSpec((1, tn), lambda i, j, k: (0, j)),    # bias tile
            ],
            out_specs=pl.BlockSpec((tm, tn), lambda i, j, k: (i, j)),
            scratch_shapes=scratch,
        ),
        compiler_params=pltpu.CompilerParams(
            dimension_semantics=("parallel", "parallel", "arbitrary"),
            vmem_limit_bytes=vmem_limit,
        ),
        cost_estimate=cost,
    )(x2, w_prep, b_prep)
    return out.reshape(orig_shape[:-1] + (N,))


def fcblock_svd_apply(x, weight, bias, *, compute_dtype=None):
    """Convenience drop-in (prep every call).  Prefer prepare_fc_params once."""
    w_prep, b_prep = prepare_fc_params(weight, bias, compute_dtype=compute_dtype)
    return fcblock_svd_forward(x, w_prep, b_prep)


def init_linear_params(key, fin, fout):
    """Matches nn.Linear.reset_parameters(): weight & bias ~ U(-1/sqrt(fin), 1/sqrt(fin))."""
    kw, kb = jax.random.split(key)
    bound = 1.0 / float(fin) ** 0.5
    weight = jax.random.uniform(kw, (fout, fin), jnp.float32, -bound, bound)
    bias = jax.random.uniform(kb, (fout,), jnp.float32, -bound, bound)
    return weight, bias


if __name__ == "__main__":
    # Small, deliberately ragged shapes (not multiples of 8/128) to exercise
    # the no-pad cdiv edges and the K zero-padding.
    fin, fout = 96, 200

    key = jax.random.PRNGKey(0)
    kx1, kx2, kx3, kp = jax.random.split(key, 4)
    weight, bias = init_linear_params(kp, fin, fout)

    # One-time parameter preparation (transpose to [K,N], pad K, optional cast).
    w32, b32 = prepare_fc_params(weight, bias)
    wbf, bbf = prepare_fc_params(weight, bias, compute_dtype=jnp.bfloat16)

    # 1) small-M resident-x fast path, f32
    x1 = jax.random.normal(kx1, (8, fin), jnp.float32)
    out1 = fcblock_svd_forward(x1, w32, b32)
    jax.block_until_ready(out1)
    ref1 = x1 @ weight.T + bias
    assert out1.shape == (8, fout)
    assert jnp.allclose(out1, ref1, atol=1e-5, rtol=1e-5)

    # 2) leading batch dims (M = 320 after flattening), still fast path, f32
    x2 = jax.random.normal(kx2, (4, 80, fin), jnp.float32)
    out2 = fcblock_svd_forward(x2, w32, b32)
    jax.block_until_ready(out2)
    ref2 = x2 @ weight.T + bias
    assert out2.shape == (4, 80, fout)
    assert jnp.allclose(out2, ref2, atol=1e-5, rtol=1e-5)

    # 3) large-M general tiled path with ragged M edge (M = 1100), f32
    x3 = jax.random.normal(kx3, (1100, fin), jnp.float32)
    out3 = fcblock_svd_forward(x3, w32, b32)
    jax.block_until_ready(out3)
    ref3 = x3 @ weight.T + bias
    assert out3.shape == (1100, fout)
    assert jnp.allclose(out3, ref3, atol=1e-4, rtol=1e-4)

    # 4) bf16 weights / operands (f32 accumulation), fast path — loose tolerance
    out4 = fcblock_svd_forward(x1, wbf, bbf)
    jax.block_until_ready(out4)
    assert out4.dtype == jnp.float32
    assert jnp.allclose(out4, ref1, atol=5e-2, rtol=5e-2)

    # 5) bf16 activations + bf16 weights on the general path (scratch-acc kernel)
    out5 = fcblock_svd_forward(x3.astype(jnp.bfloat16), wbf, bbf)
    jax.block_until_ready(out5)
    assert out5.dtype == jnp.bfloat16
    assert jnp.allclose(out5.astype(jnp.float32), ref3, atol=8e-2, rtol=8e-2)

    # TODO(synk): task_id != -1 dispatches to the global_fcblk dict of cloned
    # Linear layers (update_global / save/load / set_similar_task) — host-side
    # module bookkeeping; the same kernel is simply called with that task's
    # prepared (W, b).

    print("KERNEL_OK")
</pallas_src>

<mosaic_0001>
module attributes {stable_mosaic.version = 11 : i64} {
  func.func @_linear_resident_x_kernel(%arg0: i32, %arg1: memref<8x128xf32, #tpu.memory_space<vmem>>, %arg2: memref<128x128xf32, #tpu.memory_space<vmem>>, %arg3: memref<1x128xf32, #tpu.memory_space<vmem>>, %arg4: memref<8x128xf32, #tpu.memory_space<vmem>>) attributes {dimension_semantics = [#tpu.dimension_semantics<parallel>], iteration_bounds = array<i64: 2>, scalar_prefetch = 0 : i64, scratch_operands = 0 : i64, tpu.core_type = #tpu.core_type<tc>, window_params = [{pipeline_mode = #tpu.pipeline_mode<synchronous>, transform_indices = @transform_0, window_bounds = array<i64: 8, 128>}, {transform_indices = @transform_1, window_bounds = array<i64: 128, 128>}, {transform_indices = @transform_2, window_bounds = array<i64: 1, 128>}, {transform_indices = @transform_3, window_bounds = array<i64: 8, 128>}]} {
    %c0 = arith.constant 0 : index
    %c0_0 = arith.constant 0 : index
    %0 = vector.load %arg1[%c0, %c0_0] : memref<8x128xf32, #tpu.memory_space<vmem>>, vector<8x128xf32>
    %c0_1 = arith.constant 0 : index
    %c0_2 = arith.constant 0 : index
    %1 = vector.load %arg2[%c0_1, %c0_2] : memref<128x128xf32, #tpu.memory_space<vmem>>, vector<128x128xf32>
    %cst = arith.constant dense<0.000000e+00> : vector<8x128xf32>
    %2 = tpu.matmul %0, %1, %cst {dimension_numbers = #tpu.dot_dimension_numbers<[1], [0], [0], [1], [0, 0, 1, 1], [], []>} : vector<8x128xf32>, vector<128x128xf32>, vector<8x128xf32> -> vector<8x128xf32>
    %c0_3 = arith.constant 0 : index
    %c0_4 = arith.constant 0 : index
    %3 = vector.load %arg3[%c0_3, %c0_4] : memref<1x128xf32, #tpu.memory_space<vmem>>, vector<1x128xf32>
    %4 = vector.broadcast %3 : vector<1x128xf32> to vector<8x128xf32>
    %5 = arith.addf %2, %4 : vector<8x128xf32>
    %c0_5 = arith.constant 0 : index
    %c0_6 = arith.constant 0 : index
    %6 = vector.load %arg4[%c0_5, %c0_6] : memref<8x128xf32, #tpu.memory_space<vmem>>, vector<8x128xf32>
    tpu.vector_store %arg4[%c0_5, %c0_6], %5 {strides = array<i32>} : memref<8x128xf32, #tpu.memory_space<vmem>>, vector<8x128xf32>,
    return
  }
  func.func @transform_0(%arg0: i32) -> (i32, i32) {
    %c0_i32 = arith.constant 0 : i32
    %c0_i32_0 = arith.constant 0 : i32
    %c0_i32_1 = arith.constant 0 : i32
    return %c0_i32, %c0_i32_0 : i32, i32
  }
  func.func @transform_1(%arg0: i32) -> (i32, i32) {
    %c0_i32 = arith.constant 0 : i32
    %c0_i32_0 = arith.constant 0 : i32
    return %c0_i32, %arg0 : i32, i32
  }
  func.func @transform_2(%arg0: i32) -> (i32, i32) {
    %c0_i32 = arith.constant 0 : i32
    %c0_i32_0 = arith.constant 0 : i32
    return %c0_i32, %arg0 : i32, i32
  }
  func.func @transform_3(%arg0: i32) -> (i32, i32) {
    %c0_i32 = arith.constant 0 : i32
    %c0_i32_0 = arith.constant 0 : i32
    return %c0_i32, %arg0 : i32, i32
  }
}

</mosaic_0001>

<llo_original>
// kernel: fcblock_svd_forward.1
$region0: #{fcblock_svd_forward.1}
  #allocation0 [shape = 'u32[]', space=smem, size = 0x4, offset = 0x4, fixed_abs, tag = 'smem constant byte address 0x4 - core index']
  #allocation1 [shape = 'u32[144,128]{1,0:T(1,128)}', space=vmem, size = 0x12000, scoped, tag = 'internal scratch']
  %s0 = inlined_call_operand.vmem [shape: f32[8,128], index: 0, kind: input, shape index: {}]
  %s1 = inlined_call_operand.vmem [shape: f32[128,200], index: 1, kind: input, shape index: {}]
  %s2 = inlined_call_operand.vmem [shape: f32[1,200], index: 2, kind: input, shape index: {}]
  %s3 = inlined_call_operand.hbm [shape: f32[8,200], index: 3, kind: output, shape index: {}]
  %s4 = sld [smem:[#allocation0]]
  $region83: #{fcblock_svd_forward.1} parent=0
    _
  %s6 = ssub.s32 1, %s4
  %s7 = scalar_select 0, %s6, %s4
  $region1: #{fcblock_svd_forward.1} parent=0
    #allocation2 [shape = 'u8[131072]{0}', space=vmem, size = 0x20000, scoped, tag = 'input window, operand 1']
    #allocation3 [shape = 'u8[8192]{0}', space=vmem, size = 0x2000, scoped, tag = 'output window, operand 0']
    #allocation4 [shape = 's32[2]{0}', space=sflag, size = 0x8, scoped, tag = 'scoped memory for fcblock_svd_forward.1']
    %8 = vsyncpa [#allocation4], 0
    %s9 = scalar_lea.sflag [#allocation4], 1
    %10 = vsyncpa %s9, 0
    loop: start=0, step=1, limit=4
    $region2: #{fcblock_svd_forward.1} parent=1 // loop_pre_header
      _
    $region3: #{fcblock_svd_forward.1} parent=1 // loop_header
      %s12 = sphi 0, %s16
      %p13 = scmp.ge.s32.totalorder %s12, 4
      %s20 = sphi 0, %s20
      %s22 = sphi 0, %s20
      %s23 = sphi 0, %s22
      %s37 = sphi 0, %s23
      %s43 = sphi 0, %s45
      %s46 = sphi 0, %s43
      %s47 = sphi 0, %s46
      %s63 = sphi 0, %s47
      %s69 = sphi 0, %s71
      %s72 = sphi 0, %s69
      %s73 = sphi 0, %s72
      %s89 = sphi 0, %s73
      %s95 = sphi 0, %s97
      %s98 = sphi 0, %s95
      %s99 = sphi 0, %s98
      %s115 = sphi 0, %s99
    $region4: #{fcblock_svd_forward.1} parent=1 // loop_header_branch
      %15 = sbr.rel (%p13) target = $region8
    $region5: #{fcblock_svd_forward.1} parent=1 // loop_body
      %s17 = ssub.s32 %s12, 1
      %s18 = ssub.s32 %s12, 2
      %s19 = sadd.s32 %s12, 1
      %s21 = sadd.s32 %s20, 1
      %p24 = scmp.eq.s32.totalorder %s12, 1
      %p25 = scmp.ne.s32.totalorder %s20, %s22
      %p26 = scmp.eq.s32.totalorder %s12, 0
      %p27 = por %p25, %p26
      %p28 = scmp.ne.s32.totalorder %s20, %s22
      %p29 = scmp.eq.s32.totalorder %s17, 1
      %p30 = por %p28, %p29
      %p31 = scmp.ne.s32.totalorder %s22, %s23
      %p32 = scmp.eq.s32.totalorder %s17, 0
      %p33 = por %p31, %p32
      %p34 = scmp.ne.s32.totalorder %s22, %s23
      %p35 = scmp.eq.s32.totalorder %s18, 1
      %p36 = por %p34, %p35
      %p38 = scmp.ne.s32.totalorder %s23, %s37
      %p39 = scmp.eq.s32.totalorder %s18, 0
      %p40 = por %p38, %p39
      %s41 = ssub.s32 %s12, %s19
      %p42 = scmp.eq.s32.totalorder %s41, 0
      %s44 = sadd.s32 %s43, 1
      %s45 = scalar_select %p42, %s43, %s44
      %p48 = pneg %p42
      %p49 = scmp.eq.s32.totalorder %s12, 1
      %p50 = por %p48, %p49
      %p51 = scmp.ne.s32.totalorder %s43, %s46
      %p52 = scmp.eq.s32.totalorder %s12, 0
      %p53 = por %p51, %p52
      %p54 = scmp.ne.s32.totalorder %s43, %s46
      %p55 = scmp.eq.s32.totalorder %s17, 1
      %p56 = por %p54, %p55
      %p57 = scmp.ne.s32.totalorder %s46, %s47
      %p58 = scmp.eq.s32.totalorder %s17, 0
      %p59 = por %p57, %p58
      %p60 = scmp.ne.s32.totalorder %s46, %s47
      %p61 = scmp.eq.s32.totalorder %s18, 1
      %p62 = por %p60, %p61
      %p64 = scmp.ne.s32.totalorder %s47, %s63
      %p65 = scmp.eq.s32.totalorder %s18, 0
      %p66 = por %p64, %p65
      %s67 = ssub.s32 %s12, %s19
      %p68 = scmp.eq.s32.totalorder %s67, 0
      %s70 = sadd.s32 %s69, 1
      %s71 = scalar_select %p68, %s69, %s70
      %p74 = pneg %p68
      %p75 = scmp.eq.s32.totalorder %s12, 1
      %p76 = por %p74, %p75
      %p77 = scmp.ne.s32.totalorder %s69, %s72
      %p78 = scmp.eq.s32.totalorder %s12, 0
      %p79 = por %p77, %p78
      %p80 = scmp.ne.s32.totalorder %s69, %s72
      %p81 = scmp.eq.s32.totalorder %s17, 1
      %p82 = por %p80, %p81
      %p83 = scmp.ne.s32.totalorder %s72, %s73
      %p84 = scmp.eq.s32.totalorder %s17, 0
      %p85 = por %p83, %p84
      %p86 = scmp.ne.s32.totalorder %s72, %s73
      %p87 = scmp.eq.s32.totalorder %s18, 1
      %p88 = por %p86, %p87
      %p90 = scmp.ne.s32.totalorder %s73, %s89
      %p91 = scmp.eq.s32.totalorder %s18, 0
      %p92 = por %p90, %p91
      %s93 = ssub.s32 %s12, %s19
      %p94 = scmp.eq.s32.totalorder %s93, 0
      %s96 = sadd.s32 %s95, 1
      %s97 = scalar_select %p94, %s95, %s96
      %p100 = pneg %p94
      %p101 = scmp.eq.s32.totalorder %s12, 1
      %p102 = por %p100, %p101
      %p103 = scmp.ne.s32.totalorder %s95, %s98
      %p104 = scmp.eq.s32.totalorder %s12, 0
      %p105 = por %p103, %p104
      %p106 = scmp.ne.s32.totalorder %s95, %s98
      %p107 = scmp.eq.s32.totalorder %s17, 1
      %p108 = por %p106, %p107
      %p109 = scmp.ne.s32.totalorder %s98, %s99
      %p110 = scmp.eq.s32.totalorder %s17, 0
      %p111 = por %p109, %p110
      %p112 = scmp.ne.s32.totalorder %s98, %s99
      %p113 = scmp.eq.s32.totalorder %s18, 1
      %p114 = por %p112, %p113
      %p116 = scmp.ne.s32.totalorder %s99, %s115
      %p117 = scmp.eq.s32.totalorder %s18, 0
      %p118 = por %p116, %p117
      %p119 = scmp.le.s32.totalorder 1, %s12
      %p120 = scmp.lt.s32.totalorder %s12, 3
      %p121 = pnand %p119, %p120
      %p122 = pneg %p121
      // Predicated region
      $region9: #{fcblock_svd_forward.1} parent=5 // pred_check
        _
      $region10: #{fcblock_svd_forward.1} parent=5 // pred_check_branch
        %124 = sbr.rel (%p121) target = $region12
      $region11: #{fcblock_svd_forward.1} parent=5 // pred_region
        %s125 = ssub.s32 %s12, 1
        // Predicated region
        $region13: #{fcblock_svd_forward.1} parent=11 // pred_check
          %p126 = pneg %p33
        $region14: #{fcblock_svd_forward.1} parent=11 // pred_check_branch
          %128 = sbr.rel (%p126) target = $region16
        $region15: #{fcblock_svd_forward.1} parent=11 // pred_region
          _
        $region16: #{fcblock_svd_forward.1} parent=11 // pred_fallthru
          _
      $region12: #{fcblock_svd_forward.1} parent=5 // pred_fallthru
        _
      %p129 = scmp.lt.s32.totalorder %s12, 2
      // Predicated region
      $region17: #{fcblock_svd_forward.1} parent=5 // pred_check
        %p130 = pneg %p129
      $region18: #{fcblock_svd_forward.1} parent=5 // pred_check_branch
        %132 = sbr.rel (%p130) target = $region20
      $region19: #{fcblock_svd_forward.1} parent=5 // pred_region
        // Predicated region
        $region21: #{fcblock_svd_forward.1} parent=19 // pred_check
          %p133 = pneg %p53
        $region22: #{fcblock_svd_forward.1} parent=19 // pred_check_branch
          %135 = sbr.rel (%p133) target = $region24
        $region23: #{fcblock_svd_forward.1} parent=19 // pred_region
          %s136 = sand.u32 %s43, 1
          %s137 = sand.u32 %s43, 1
          %s138 = smul.addr %s137, 128
          %s139 = scalar_lea.vmem [#allocation2], %s138
          %s140 = smul.addr %s12, 8
          %s141 = scalar_lea.vmem %s1, %s140
          // Predicated region
          $region25: #{fcblock_svd_forward.1} parent=23 // pred_check
            _
          $region26: #{fcblock_svd_forward.1} parent=23 // pred_check_branch
            %143 = sbr.rel (0) target = $region28
          $region27: #{fcblock_svd_forward.1} parent=23 // pred_region
            // Predicated region
            $region29: #{fcblock_svd_forward.1} parent=27 // pred_check
              _
            $region30: #{fcblock_svd_forward.1} parent=27 // pred_check_branch
              %145 = sbr.rel (0) target = $region32
            $region31: #{fcblock_svd_forward.1} parent=27 // pred_region
              // Predicated region
              $region44: #{fcblock_svd_forward.1} parent=31 // pred_check
                _
              $region45: #{fcblock_svd_forward.1} parent=31 // pred_check_branch
                %190 = sbr.rel (0) target = $region47
              $region46: #{fcblock_svd_forward.1} parent=31 // pred_region
                loop: start=0, step=1, limit=1
                $region48: #{fcblock_svd_forward.1} parent=46 // loop_pre_header
                  _
                $region49: #{fcblock_svd_forward.1} parent=46 // loop_header
                  %s192 = sphi 0, %s196
                  %p193 = scmp.ge.s32.totalorder %s192, 1
                  %s197 = sphi %s141, %s141
                  %s198 = sphi %s139, %s139
                $region50: #{fcblock_svd_forward.1} parent=46 // loop_header_branch
                  %195 = sbr.rel (%p193) target = $region54
                $region51: #{fcblock_svd_forward.1} parent=46 // loop_body
                  %v199 = vld [vmem:[%s197] sm:$0xff]
                  %200 = vst [vmem:[%s198] sm:$0xff] %v199
                  %v201 = vld [vmem:[%s197 + $0x10] sm:$0xff]
                  %202 = vst [vmem:[%s198 + $0x8] sm:$0xff] %v201
                  %v203 = vld [vmem:[%s197 + $0x20] sm:$0xff]
                  %204 = vst [vmem:[%s198 + $0x10] sm:$0xff] %v203
                  %v205 = vld [vmem:[%s197 + $0x30] sm:$0xff]
                  %206 = vst [vmem:[%s198 + $0x18] sm:$0xff] %v205
                  %v207 = vld [vmem:[%s197 + $0x40] sm:$0xff]
                  %208 = vst [vmem:[%s198 + $0x20] sm:$0xff] %v207
                  %v209 = vld [vmem:[%s197 + $0x50] sm:$0xff]
                  %210 = vst [vmem:[%s198 + $0x28] sm:$0xff] %v209
                  %v211 = vld [vmem:[%s197 + $0x60] sm:$0xff]
                  %212 = vst [vmem:[%s198 + $0x30] sm:$0xff] %v211
                  %v213 = vld [vmem:[%s197 + $0x70] sm:$0xff]
                  %214 = vst [vmem:[%s198 + $0x38] sm:$0xff] %v213
                  %v215 = vld [vmem:[%s197 + $0x80] sm:$0xff]
                  %216 = vst [vmem:[%s198 + $0x40] sm:$0xff] %v215
                  %v217 = vld [vmem:[%s197 + $0x90] sm:$0xff]
                  %218 = vst [vmem:[%s198 + $0x48] sm:$0xff] %v217
                  %v219 = vld [vmem:[%s197 + $0xa0] sm:$0xff]
                  %220 = vst [vmem:[%s198 + $0x50] sm:$0xff] %v219
                  %v221 = vld [vmem:[%s197 + $0xb0] sm:$0xff]
                  %222 = vst [vmem:[%s198 + $0x58] sm:$0xff] %v221
                  %v223 = vld [vmem:[%s197 + $0xc0] sm:$0xff]
                  %224 = vst [vmem:[%s198 + $0x60] sm:$0xff] %v223
                  %v225 = vld [vmem:[%s197 + $0xd0] sm:$0xff]
                  %226 = vst [vmem:[%s198 + $0x68] sm:$0xff] %v225
                  %v227 = vld [vmem:[%s197 + $0xe0] sm:$0xff]
                  %228 = vst [vmem:[%s198 + $0x70] sm:$0xff] %v227
                  %v229 = vld [vmem:[%s197 + $0xf0] sm:$0xff]
                  %230 = vst [vmem:[%s198 + $0x78] sm:$0xff] %v229
                $region52: #{fcblock_svd_forward.1} parent=46 // loop_footer
                  %s196 = sadd.s32 1, %s192
                $region53: #{fcblock_svd_forward.1} parent=46 // loop_footer_branch
                  %191 = sbr.rel target = $region49
                $region54: #{fcblock_svd_forward.1} parent=46 // loop_exit
                  _
              $region47: #{fcblock_svd_forward.1} parent=31 // pred_fallthru
                _
              // Predicated region
              $region55: #{fcblock_svd_forward.1} parent=31 // pred_check
                _
              $region56: #{fcblock_svd_forward.1} parent=31 // pred_check_branch
                %232 = sbr.rel target = $region58
              $region57: #{fcblock_svd_forward.1} parent=31 // pred_region
                _
              $region58: #{fcblock_svd_forward.1} parent=31 // pred_fallthru
                _
            $region32: #{fcblock_svd_forward.1} parent=27 // pred_fallthru
              _
            // Predicated region
            $region33: #{fcblock_svd_forward.1} parent=27 // pred_check
              _
            $region34: #{fcblock_svd_forward.1} parent=27 // pred_check_branch
              %147 = sbr.rel target = $region36
            $region35: #{fcblock_svd_forward.1} parent=27 // pred_region
              loop: start=0, step=1, limit=1
              $region37: #{fcblock_svd_forward.1} parent=35 // loop_pre_header
                _
              $region38: #{fcblock_svd_forward.1} parent=35 // loop_header
                %s150 = sphi 0, %s154
                %p151 = scmp.ge.s32.totalorder %s150, 1
                %s155 = sphi %s141, %s141
                %s156 = sphi %s139, %s139
              $region39: #{fcblock_svd_forward.1} parent=35 // loop_header_branch
                %153 = sbr.rel (%p151) target = $region43
              $region40: #{fcblock_svd_forward.1} parent=35 // loop_body
                %v157 = vld [vmem:[%s155] sm:$0xff]
                %158 = vst [vmem:[%s156] sm:$0xff] %v157
                %v159 = vld [vmem:[%s155 + $0x10] sm:$0xff]
                %160 = vst [vmem:[%s156 + $0x8] sm:$0xff] %v159
                %v161 = vld [vmem:[%s155 + $0x20] sm:$0xff]
                %162 = vst [vmem:[%s156 + $0x10] sm:$0xff] %v161
                %v163 = vld [vmem:[%s155 + $0x30] sm:$0xff]
                %164 = vst [vmem:[%s156 + $0x18] sm:$0xff] %v163
                %v165 = vld [vmem:[%s155 + $0x40] sm:$0xff]
                %166 = vst [vmem:[%s156 + $0x20] sm:$0xff] %v165
                %v167 = vld [vmem:[%s155 + $0x50] sm:$0xff]
                %168 = vst [vmem:[%s156 + $0x28] sm:$0xff] %v167
                %v169 = vld [vmem:[%s155 + $0x60] sm:$0xff]
                %170 = vst [vmem:[%s156 + $0x30] sm:$0xff] %v169
                %v171 = vld [vmem:[%s155 + $0x70] sm:$0xff]
                %172 = vst [vmem:[%s156 + $0x38] sm:$0xff] %v171
                %v173 = vld [vmem:[%s155 + $0x80] sm:$0xff]
                %174 = vst [vmem:[%s156 + $0x40] sm:$0xff] %v173
                %v175 = vld [vmem:[%s155 + $0x90] sm:$0xff]
                %176 = vst [vmem:[%s156 + $0x48] sm:$0xff] %v175
                %v177 = vld [vmem:[%s155 + $0xa0] sm:$0xff]
                %178 = vst [vmem:[%s156 + $0x50] sm:$0xff] %v177
                %v179 = vld [vmem:[%s155 + $0xb0] sm:$0xff]
                %180 = vst [vmem:[%s156 + $0x58] sm:$0xff] %v179
                %v181 = vld [vmem:[%s155 + $0xc0] sm:$0xff]
                %182 = vst [vmem:[%s156 + $0x60] sm:$0xff] %v181
                %v183 = vld [vmem:[%s155 + $0xd0] sm:$0xff]
                %184 = vst [vmem:[%s156 + $0x68] sm:$0xff] %v183
                %v185 = vld [vmem:[%s155 + $0xe0] sm:$0xff]
                %186 = vst [vmem:[%s156 + $0x70] sm:$0xff] %v185
                %v187 = vld [vmem:[%s155 + $0xf0] sm:$0xff]
                %188 = vst [vmem:[%s156 + $0x78] sm:$0xff] %v187
              $region41: #{fcblock_svd_forward.1} parent=35 // loop_footer
                %s154 = sadd.s32 1, %s150
              $region42: #{fcblock_svd_forward.1} parent=35 // loop_footer_branch
                %149 = sbr.rel target = $region38
              $region43: #{fcblock_svd_forward.1} parent=35 // loop_exit
                _
            $region36: #{fcblock_svd_forward.1} parent=27 // pred_fallthru
              _
          $region28: #{fcblock_svd_forward.1} parent=23 // pred_fallthru
            _
          %233 = vnop
        $region24: #{fcblock_svd_forward.1} parent=19 // pred_fallthru
          _
        // Predicated region
        $region59: #{fcblock_svd_forward.1} parent=19 // pred_check
          %p234 = pneg %p79
        $region60: #{fcblock_svd_forward.1} parent=19 // pred_check_branch
          %236 = sbr.rel (%p234) target = $region62
        $region61: #{fcblock_svd_forward.1} parent=19 // pred_region
          %p237 = scmp.lt.s32.totalorder %s12, 1
          %s238 = scalar_select %p237, %s12, 1
          %s239 = scalar_lea.vmem %s2, %s238
        $region62: #{fcblock_svd_forward.1} parent=19 // pred_fallthru
          _
      $region20: #{fcblock_svd_forward.1} parent=5 // pred_fallthru
        _
      %p240 = scmp.le.s32.totalorder 1, %s12
      %p241 = scmp.lt.s32.totalorder %s12, 3
      %p242 = pnand %p240, %p241
      %p243 = pneg %p242
      // Predicated region
      $region63: #{fcblock_svd_forward.1} parent=5 // pred_check
        _
      $region64: #{fcblock_svd_forward.1} parent=5 // pred_check_branch
        %245 = sbr.rel (%p242) target = $region66
      $region65: #{fcblock_svd_forward.1} parent=5 // pred_region
        %s246 = ssub.s32 %s12, 1
        %s247 = sand.u32 %s46, 1
        %s248 = sand.u32 %s46, 1
        %s249 = smul.addr %s248, 128
        %s250 = scalar_lea.vmem [#allocation2], %s249
        // Predicated region
        $region67: #{fcblock_svd_forward.1} parent=65 // pred_check
          %p251 = pneg %p59
        $region68: #{fcblock_svd_forward.1} parent=65 // pred_check_branch
          %253 = sbr.rel (%p251) target = $region70
        $region69: #{fcblock_svd_forward.1} parent=65 // pred_region
          _
        $region70: #{fcblock_svd_forward.1} parent=65 // pred_fallthru
          _
        %p254 = pneg %p33
        %p255 = pneg %p30
        %s256 = sand.u32 %s46, 1
        %s257 = sand.u32 %s46, 1
        %s258 = smul.addr %s257, 128
        %s259 = scalar_lea.vmem [#allocation2], %s258
        %p260 = pneg %p59
        %p261 = pneg %p56
        %p262 = scmp.lt.s32.totalorder %s17, 1
        %s263 = scalar_select %p262, %s17, 1
        %s264 = scalar_lea.vmem %s2, %s263
        %p265 = pneg %p85
        %p266 = pneg %p82
        %p267 = pneg %p111
        %p268 = pneg %p108
        %s269 = sand.u32 %s98, 1
        %s270 = scalar_lea.sflag [#allocation4], %s269
        %s271 = sand.u32 %s98, 1
        %s272 = smul.addr %s271, 8
        %s273 = scalar_lea.vmem [#allocation3], %s272
        %p274 = scmp.lt.s32.totalorder %s17, 1
        %s275 = scalar_select %p274, %s17, 1
        %s276 = scalar_lea.vmem %s2, %s275
        %v277 = vld [vmem:[%s0] sm:$0xff]
        %v278 = vld [vmem:[%s250] sm:$0xff]
        %v279 = vld [vmem:[%s250 + $0x8] sm:$0xff]
        %v280 = vld [vmem:[%s250 + $0x10] sm:$0xff]
        %v281 = vld [vmem:[%s250 + $0x18] sm:$0xff]
        %v282 = vld [vmem:[%s250 + $0x20] sm:$0xff]
        %v283 = vld [vmem:[%s250 + $0x28] sm:$0xff]
        %v284 = vld [vmem:[%s250 + $0x30] sm:$0xff]
        %v285 = vld [vmem:[%s250 + $0x38] sm:$0xff]
        %v286 = vld [vmem:[%s250 + $0x40] sm:$0xff]
        %v287 = vld [vmem:[%s250 + $0x48] sm:$0xff]
        %v288 = vld [vmem:[%s250 + $0x50] sm:$0xff]
        %v289 = vld [vmem:[%s250 + $0x58] sm:$0xff]
        %v290 = vld [vmem:[%s250 + $0x60] sm:$0xff]
        %v291 = vld [vmem:[%s250 + $0x68] sm:$0xff]
        %v292 = vld [vmem:[%s250 + $0x70] sm:$0xff]
        %v293 = vld [vmem:[%s250 + $0x78] sm:$0xff]
        %v294 = vld [vmem:[%s276] sm:$0x1]
        %v296 = vlaneseq
        %v297 = vshrl.u32 %v296, 7
        %v298 = vsub.s32 0, %v297
        %v299 = vrot.slane %v294, %v298
        %301 = vmatprep.subr.mxu0 0.0
        %302 = vmatpush1.msra.mxu0 %v278
        %303 = vmatprep.subr.mxu0 0.0
        %304 = vmatpush1.msra.mxu0 %v279
        %305 = vmatprep.subr.mxu0 0.0
        %306 = vmatpush1.msra.mxu0 %v280
        %307 = vmatprep.subr.mxu0 0.0
        %308 = vmatpush1.msra.mxu0 %v281
        %309 = vmatprep.subr.mxu0 0.0
        %310 = vmatpush1.msra.mxu0 %v282
        %311 = vmatprep.subr.mxu0 0.0
        %312 = vmatpush1.msra.mxu0 %v283
        %313 = vmatprep.subr.mxu0 0.0
        %314 = vmatpush1.msra.mxu0 %v284
        %315 = vmatprep.subr.mxu0 0.0
        %316 = vmatpush1.msra.mxu0 %v285
        %317 = vmatprep.subr.mxu0 0.0
        %318 = vmatpush1.msra.mxu0 %v286
        %319 = vmatprep.subr.mxu0 0.0
        %320 = vmatpush1.msra.mxu0 %v287
        %321 = vmatprep.subr.mxu0 0.0
        %322 = vmatpush1.msra.mxu0 %v288
        %323 = vmatprep.subr.mxu0 0.0
        %324 = vmatpush1.msra.mxu0 %v289
        %325 = vmatprep.subr.mxu0 0.0
        %326 = vmatpush1.msra.mxu0 %v290
        %327 = vmatprep.subr.mxu0 0.0
        %328 = vmatpush1.msra.mxu0 %v291
        %329 = vmatprep.subr.mxu0 0.0
        %330 = vmatpush1.msra.mxu0 %v292
        %331 = vmatprep.subr.mxu0 0.0
        %332 = vmatpush1.msra.mxu0 %v293
        %333 = vmatprep.subr.mxu0 0.0
        %334 = vmatpush1.msra.mxu0 0.0
        %335 = vmatprep.subr.mxu0 0.0
        %336 = vmatpush1.msra.mxu0 0.0
        %337 = vmatprep.subr.mxu0 0.0
        %338 = vmatpush1.msra.mxu0 0.0
        %339 = vmatprep.subr.mxu0 0.0
        %340 = vmatpush1.msra.mxu0 0.0
        %341 = vmatprep.subr.mxu0 0.0
        %342 = vmatpush1.msra.mxu0 0.0
        %343 = vmatprep.subr.mxu0 0.0
        %344 = vmatpush1.msra.mxu0 0.0
        %345 = vmatprep.subr.mxu0 0.0
        %346 = vmatpush1.msra.mxu0 0.0
        %347 = vmatprep.subr.mxu0 0.0
        %348 = vmatpush1.msra.mxu0 0.0
        %349 = vmatprep.subr.mxu0 0.0
        %350 = vmatpush1.msra.mxu0 0.0
        %351 = vmatprep.subr.mxu0 0.0
        %352 = vmatpush1.msra.mxu0 0.0
        %353 = vmatprep.subr.mxu0 0.0
        %354 = vmatpush1.msra.mxu0 0.0
        %355 = vmatprep.subr.mxu0 0.0
        %356 = vmatpush1.msra.mxu0 0.0
        %357 = vmatprep.subr.mxu0 0.0
        %358 = vmatpush1.msra.mxu0 0.0
        %359 = vmatprep.subr.mxu0 0.0
        %360 = vmatpush1.msra.mxu0 0.0
        %361 = vmatprep.subr.mxu0 0.0
        %362 = vmatpush1.msra.mxu0 0.0
        %363 = vmatprep.subr.mxu0 0.0
        %364 = vmatpush1.msra.mxu0 0.0
        %365 = vmatprep.mubr.f32.mxu0 0.0
        %366 = vmatmul.mubr.f32.gmra.mrb[0].mxu0 %v277
        %v367 = vpop.f32.mrb[0].mxu0
        %v368 = vadd.f32 %v299, %v367
        %v369 = vpop.f32.mrb[0].mxu0
        %370 = vdwg.mxu0
        %371 = vst [vmem:[%s273] sm:$0xff] %v368
        %s372 = sand.u32 %s98, 1
        %s373 = scalar_lea.sflag [#allocation4], %s372
        %s374 = sand.u32 %s98, 1
        %s375 = smul.addr %s374, 8
        %s376 = scalar_lea.vmem [#allocation3], %s375
        // Predicated region
        $region71: #{fcblock_svd_forward.1} parent=65 // pred_check
          %p377 = pneg %p108
        $region72: #{fcblock_svd_forward.1} parent=65 // pred_check_branch
          %379 = sbr.rel (%p377) target = $region74
        $region73: #{fcblock_svd_forward.1} parent=65 // pred_region
          %s381 = ssub.s32 128, 128
          %382 = vsyncadd %s373, %s381
          %s383 = smul.addr %s17, 128
          %s384 = scalar_lea.hbm %s3, %s383
          %s386 = sshll.u32 %s376, 4
          %s387 = int_to_ptr.vmem [resolvable:$true] %s386
          %389 = dma.vmem_to_hbm [thread:$0]  %s387, 128, %s384, %s373
        $region74: #{fcblock_svd_forward.1} parent=65 // pred_fallthru
          _
      $region66: #{fcblock_svd_forward.1} parent=5 // pred_fallthru
        _
      %p390 = scmp.le.s32.totalorder 2, %s12
      // Predicated region
      $region75: #{fcblock_svd_forward.1} parent=5 // pred_check
        %p391 = pneg %p390
      $region76: #{fcblock_svd_forward.1} parent=5 // pred_check_branch
        %393 = sbr.rel (%p391) target = $region78
      $region77: #{fcblock_svd_forward.1} parent=5 // pred_region
        %s394 = ssub.s32 %s12, 2
        // Predicated region
        $region79: #{fcblock_svd_forward.1} parent=77 // pred_check
          %p395 = pneg %p114
        $region80: #{fcblock_svd_forward.1} parent=77 // pred_check_branch
          %397 = sbr.rel (%p395) target = $region82
        $region81: #{fcblock_svd_forward.1} parent=77 // pred_region
          %s398 = sand.u32 %s99, 1
          %s399 = scalar_lea.sflag [#allocation4], %s398
          %s400 = sand.u32 %s99, 1
          %s401 = smul.addr %s400, 8
          %s402 = scalar_lea.vmem [#allocation3], %s401
          %403 = dma.done %s399, 128
        $region82: #{fcblock_svd_forward.1} parent=77 // pred_fallthru
          _
      $region78: #{fcblock_svd_forward.1} parent=5 // pred_fallthru
        _
    $region6: #{fcblock_svd_forward.1} parent=1 // loop_footer
      %s16 = sadd.s32 1, %s12
    $region7: #{fcblock_svd_forward.1} parent=1 // loop_footer_branch
      %11 = sbr.rel target = $region3
    $region8: #{fcblock_svd_forward.1} parent=1 // loop_exit
      _
    %404 = vsyncpa [#allocation4], 1
    %s405 = scalar_lea.sflag [#allocation4], 1
    %406 = vsyncpa %s405, 1

</llo_original>
